<compile_context>
chip_gen: v7x
topology: tpu7x:2x2x1
jax: 0.10.0
libtpu: 0.0.40
codegen_flags: <defaults>
</compile_context>

<pallas_src>
import functools

import jax
import jax.numpy as jnp
from jax.experimental import pallas as pl
from jax.experimental.pallas import tpu as pltpu


# Below this many elements per image tensor, a plain jnp expression beats the
# fixed pallas_call launch + pipeline fill/drain cost.
_PALLAS_MIN_ELEMS = 1 << 20  # ~4 MiB of f32 per tensor


def _chip_config():
    """Chip-aware (target block bytes per tensor, physical VMEM, #TensorCores)."""
    vmem_phys = 128 << 20
    try:
        v = getattr(pltpu.get_tpu_info(), "vmem_capacity_bytes", None)
        if v:
            vmem_phys = int(v)
    except Exception:
        pass
    kind = ""
    try:
        kind = jax.devices()[0].device_kind.lower()
    except Exception:
        pass
    num_cores = 2 if "v7" in kind else 1
    # Pure HBM-streaming kernel: faster HBM => the ~0.35us fixed per-step
    # overhead matters more => bigger blocks.
    if "v7" in kind or vmem_phys <= (64 << 20):
        target_bytes = 4 << 20          # v7x: ~3.2 TB/s HBM, 64 MiB VMEM
    elif "v6" in kind:
        target_bytes = 2 << 20          # v6e: ~1.4 TB/s HBM
    elif "v5" in kind:
        target_bytes = 1 << 20          # v5e: ~0.8 TB/s HBM, little upside
    else:
        target_bytes = 2 << 20
    return target_bytes, vmem_phys, num_cores


def _block_dims(rows, cols, target_elems, num_cores):
    """Pick a (sublane, lane) block for a (rows, cols) f32-ish array.

    `cols` is already a multiple of 128 (caller pads), so any lane block that
    is a multiple of 128 (or the full dim) is legal; sublane blocks must be a
    multiple of 8 or the full dim.
    """
    min_br = rows if rows < 8 else 8
    if min_br * cols <= target_elems:
        bc = cols                                        # full dim: always legal
    else:
        bc = max(128, (target_elems // min_br // 128) * 128)
        bc = min(bc, cols)                               # cols is 128-multiple
    max_br = max(min_br, target_elems // bc)
    if rows <= max_br:
        br = rows                                        # full dim: always legal
    else:
        br = max(8, (max_br // 8) * 8)
    # Split the row axis across TensorCores on multi-core chips (v7x) so a
    # single-block grid does not leave half the chip's DMA capacity idle.
    if num_cores > 1 and rows >= 8 * num_cores and pl.cdiv(rows, br) < num_cores:
        br = max(8, ((rows // num_cores) // 8) * 8)
    return br, bc


def _make_kernel(n_imgs):
    def kernel(scale_ref, bias_ref, *refs):
        scale = scale_ref[...]                           # (br, 1) f32
        bias = bias_ref[...]                             # (br, 1) f32
        for x_ref, o_ref in zip(refs[:n_imgs], refs[n_imgs:]):
            x = x_ref[...].astype(jnp.float32)
            # fused form of (x - mean) / std; cast only at the final store
            o_ref[...] = (x * scale + bias).astype(o_ref.dtype)
    return kernel


@functools.partial(jax.jit, static_argnames=("in_place",))
def _normalize_many(imgs, mean, std, *, in_place=True):
    """Normalize a tuple of identically-shaped NCHW tensors in one pallas_call."""
    n_imgs = len(imgs)
    n, c, h, w = imgs[0].shape
    in_dtype = imgs[0].dtype
    out_dtype = in_dtype if jnp.issubdtype(in_dtype, jnp.floating) else jnp.float32
    rows, cols = n * c, h * w

    target_bytes, vmem_phys, num_cores = _chip_config()
    # Never let the double-buffered working set exceed ~half of physical VMEM.
    while 2 * 2 * n_imgs * target_bytes > vmem_phys // 2 and target_bytes > (256 << 10):
        target_bytes //= 2
    target_elems = target_bytes // 4

    # Tiny C-length precompute stays in f32 (bias = -mean/std would lose
    # precision in bf16); the cast to the output dtype happens at the store.
    mean_f = mean.astype(jnp.float32)
    std_f = std.astype(jnp.float32)
    scale_col = jnp.broadcast_to(1.0 / std_f, (n, c)).reshape(rows, 1)
    bias_col = jnp.broadcast_to(-mean_f / std_f, (n, c)).reshape(rows, 1)

    flat = [x.reshape(rows, cols) for x in imgs]
    if not jnp.issubdtype(in_dtype, jnp.floating):
        flat = [x.astype(out_dtype) for x in flat]       # e.g. uint8 images

    # Lane-dense layout for arbitrary H,W: pad the last dim to a multiple of
    # 128 so stores are unmasked full-width `vst` (slice back afterwards).
    cols_p = max(128, ((cols + 127) // 128) * 128)
    if cols_p != cols:
        flat = [jnp.pad(x, ((0, 0), (0, cols_p - cols))) for x in flat]

    br, bc = _block_dims(rows, cols_p, target_elems, num_cores)
    grid = (pl.cdiv(rows, br), pl.cdiv(cols_p, bc))

    col_spec = pl.BlockSpec((br, 1), lambda i, j: (i, 0))
    img_spec = pl.BlockSpec((br, bc), lambda i, j: (i, j))

    in_itemsize = jnp.dtype(flat[0].dtype).itemsize
    out_itemsize = jnp.dtype(out_dtype).itemsize
    # Scoped-VMEM budget from the actual double-buffered working set.
    working = 2 * (n_imgs * br * bc * (in_itemsize + out_itemsize) + 2 * br * 4)
    vmem_limit = int(min(max(working + (8 << 20), 16 << 20), vmem_phys - (4 << 20)))

    # Mirror torchvision's inplace=True: alias each image input to its output
    # (image args sit at positions 2.. after scale_col / bias_col).
    aliases = {}
    if in_place and jnp.dtype(flat[0].dtype) == jnp.dtype(out_dtype):
        aliases = {2 + i: i for i in range(n_imgs)}

    cost = pl.CostEstimate(
        flops=2 * n_imgs * rows * cols,
        transcendentals=0,
        bytes_accessed=n_imgs * rows * cols_p * (in_itemsize + out_itemsize),
    )

    outs = pl.pallas_call(
        _make_kernel(n_imgs),
        out_shape=tuple(
            jax.ShapeDtypeStruct((rows, cols_p), out_dtype) for _ in range(n_imgs)
        ),
        grid_spec=pltpu.PrefetchScalarGridSpec(
            num_scalar_prefetch=0,
            grid=grid,
            in_specs=[col_spec, col_spec] + [img_spec] * n_imgs,
            out_specs=tuple(img_spec for _ in range(n_imgs)),
        ),
        compiler_params=pltpu.CompilerParams(
            dimension_semantics=("parallel", "parallel"),
            vmem_limit_bytes=vmem_limit,
        ),
        input_output_aliases=aliases,
        cost_estimate=cost,
    )(scale_col, bias_col, *flat)

    if not isinstance(outs, (list, tuple)):
        outs = (outs,)
    outs = [o[:, :cols] if cols_p != cols else o for o in outs]
    return tuple(o.reshape(n, c, h, w) for o in outs)


class Normalize:
    """JAX/Pallas equivalent of the PyTorch `Normalize` module.

    forward: per-channel (x - mean[c]) / std[c] on pv_imgs and art_imgs;
    masks pass through untouched.
    """

    def __init__(self, mean, std, *, force_pallas=False, in_place=True):
        self.mean = jnp.asarray(mean, dtype=jnp.float32)
        self.std = jnp.asarray(std, dtype=jnp.float32)
        self.force_pallas = force_pallas
        self.in_place = in_place

    def _normalize(self, imgs):
        # Small-size early exit: the fixed launch + pipeline fill/drain cost
        # dominates for tiny tensors, so use plain jnp unless forced.
        if not self.force_pallas and imgs[0].size < _PALLAS_MIN_ELEMS:
            c = imgs[0].shape[1]
            m = self.mean.reshape(1, c, 1, 1) if self.mean.ndim == 1 else self.mean
            s = self.std.reshape(1, c, 1, 1) if self.std.ndim == 1 else self.std
            return tuple((x - m) / s for x in imgs)
        return _normalize_many(tuple(imgs), self.mean, self.std,
                               in_place=self.in_place)

    def __call__(self, pv_imgs, art_imgs, pv_mask=None, art_mask=None):
        if pv_imgs.shape == art_imgs.shape and pv_imgs.dtype == art_imgs.dtype:
            # Fused: both tensors in a single pallas_call.
            pv_imgs, art_imgs = self._normalize((pv_imgs, art_imgs))
        else:
            (pv_imgs,) = self._normalize((pv_imgs,))
            (art_imgs,) = self._normalize((art_imgs,))
        # masks pass through untouched, exactly as in the PyTorch forward
        return (pv_imgs, art_imgs, pv_mask, art_mask)


if __name__ == "__main__":
    key = jax.random.PRNGKey(0)
    k_pv, k_art, k_mask = jax.random.split(key, 3)

    N, C, H, W = 2, 4, 16, 16
    pv_imgs = jax.random.uniform(k_pv, (N, C, H, W), dtype=jnp.float32)
    art_imgs = jax.random.uniform(k_art, (N, C, H, W), dtype=jnp.float32)
    pv_mask = (jax.random.uniform(k_mask, (N, 1, H, W)) > 0.5).astype(jnp.float32)
    art_mask = None

    # Deterministic per-channel statistics (len == C).
    mean = jnp.array([0.485, 0.456, 0.406, 0.5], dtype=jnp.float32)
    std = jnp.array([0.229, 0.224, 0.225, 0.25], dtype=jnp.float32)

    # force_pallas=True so the demo exercises the Pallas path even at toy sizes.
    norm = Normalize(mean, std, force_pallas=True)
    pv_out, art_out, pv_m, art_m = norm(pv_imgs, art_imgs, pv_mask, art_mask)
    jax.block_until_ready(pv_out)
    jax.block_until_ready(art_out)

    # Reference check against plain-JAX broadcasting semantics.
    ref_pv = (pv_imgs - mean[None, :, None, None]) / std[None, :, None, None]
    ref_art = (art_imgs - mean[None, :, None, None]) / std[None, :, None, None]
    assert jnp.allclose(pv_out, ref_pv, atol=1e-5, rtol=1e-5)
    assert jnp.allclose(art_out, ref_art, atol=1e-5, rtol=1e-5)
    assert pv_m is pv_mask and art_m is None

    print("KERNEL_OK")
</pallas_src>

<mosaic_0001>
module attributes {stable_mosaic.version = 11 : i64} {
  func.func @kernel(%arg0: i32, %arg1: i32, %arg2: memref<8x1xf32, #tpu.memory_space<vmem>>, %arg3: memref<8x1xf32, #tpu.memory_space<vmem>>, %arg4: memref<8x256xf32, #tpu.memory_space<vmem>>, %arg5: memref<8x256xf32, #tpu.memory_space<vmem>>, %arg6: memref<8x256xf32, #tpu.memory_space<vmem>>, %arg7: memref<8x256xf32, #tpu.memory_space<vmem>>) attributes {dimension_semantics = [#tpu.dimension_semantics<parallel>, #tpu.dimension_semantics<parallel>], iteration_bounds = array<i64: 1, 1>, scalar_prefetch = 0 : i64, scratch_operands = 0 : i64, tpu.core_type = #tpu.core_type<tc>, window_params = [{transform_indices = @transform_0, window_bounds = array<i64: 8, 1>}, {transform_indices = @transform_1, window_bounds = array<i64: 8, 1>}, {transform_indices = @transform_2, window_bounds = array<i64: 8, 256>}, {transform_indices = @transform_3, window_bounds = array<i64: 8, 256>}, {transform_indices = @transform_4, window_bounds = array<i64: 8, 256>}, {transform_indices = @transform_5, window_bounds = array<i64: 8, 256>}]} {
    %c0 = arith.constant 0 : index
    %c0_0 = arith.constant 0 : index
    %0 = vector.load %arg2[%c0, %c0_0] : memref<8x1xf32, #tpu.memory_space<vmem>>, vector<8x1xf32>
    %c0_1 = arith.constant 0 : index
    %c0_2 = arith.constant 0 : index
    %1 = vector.load %arg3[%c0_1, %c0_2] : memref<8x1xf32, #tpu.memory_space<vmem>>, vector<8x1xf32>
    %c0_3 = arith.constant 0 : index
    %c0_4 = arith.constant 0 : index
    %2 = vector.load %arg4[%c0_3, %c0_4] : memref<8x256xf32, #tpu.memory_space<vmem>>, vector<8x256xf32>
    %3 = vector.broadcast %0 : vector<8x1xf32> to vector<8x256xf32>
    %4 = arith.mulf %2, %3 : vector<8x256xf32>
    %5 = vector.broadcast %1 : vector<8x1xf32> to vector<8x256xf32>
    %6 = arith.addf %4, %5 : vector<8x256xf32>
    %c0_5 = arith.constant 0 : index
    %c0_6 = arith.constant 0 : index
    %7 = vector.load %arg6[%c0_5, %c0_6] : memref<8x256xf32, #tpu.memory_space<vmem>>, vector<8x256xf32>
    tpu.vector_store %arg6[%c0_5, %c0_6], %6 {strides = array<i32>} : memref<8x256xf32, #tpu.memory_space<vmem>>, vector<8x256xf32>,
    %c0_7 = arith.constant 0 : index
    %c0_8 = arith.constant 0 : index
    %8 = vector.load %arg5[%c0_7, %c0_8] : memref<8x256xf32, #tpu.memory_space<vmem>>, vector<8x256xf32>
    %9 = vector.broadcast %0 : vector<8x1xf32> to vector<8x256xf32>
    %10 = arith.mulf %8, %9 : vector<8x256xf32>
    %11 = vector.broadcast %1 : vector<8x1xf32> to vector<8x256xf32>
    %12 = arith.addf %10, %11 : vector<8x256xf32>
    %c0_9 = arith.constant 0 : index
    %c0_10 = arith.constant 0 : index
    %13 = vector.load %arg7[%c0_9, %c0_10] : memref<8x256xf32, #tpu.memory_space<vmem>>, vector<8x256xf32>
    tpu.vector_store %arg7[%c0_9, %c0_10], %12 {strides = array<i32>} : memref<8x256xf32, #tpu.memory_space<vmem>>, vector<8x256xf32>,
    return
  }
  func.func @transform_0(%arg0: i32, %arg1: i32) -> (i32, i32) {
    %c0_i32 = arith.constant 0 : i32
    %c0_i32_0 = arith.constant 0 : i32
    return %arg0, %c0_i32 : i32, i32
  }
  func.func @transform_1(%arg0: i32, %arg1: i32) -> (i32, i32) {
    %c0_i32 = arith.constant 0 : i32
    %c0_i32_0 = arith.constant 0 : i32
    return %arg0, %c0_i32 : i32, i32
  }
  func.func @transform_2(%arg0: i32, %arg1: i32) -> (i32, i32) {
    %c0_i32 = arith.constant 0 : i32
    return %arg0, %arg1 : i32, i32
  }
  func.func @transform_3(%arg0: i32, %arg1: i32) -> (i32, i32) {
    %c0_i32 = arith.constant 0 : i32
    return %arg0, %arg1 : i32, i32
  }
  func.func @transform_4(%arg0: i32, %arg1: i32) -> (i32, i32) {
    %c0_i32 = arith.constant 0 : i32
    return %arg0, %arg1 : i32, i32
  }
  func.func @transform_5(%arg0: i32, %arg1: i32) -> (i32, i32) {
    %c0_i32 = arith.constant 0 : i32
    return %arg0, %arg1 : i32, i32
  }
}

</mosaic_0001>

<llo_original>
// kernel: _normalize_many.1
$region0: #{_normalize_many.1}
  #allocation0 [shape = 'u32[]', space=smem, size = 0x4, offset = 0x4, fixed_abs, tag = 'smem constant byte address 0x4 - core index']
  #allocation1 [shape = 'u32[144,128]{1,0:T(1,128)}', space=vmem, size = 0x12000, scoped, tag = 'internal scratch']
  %s0 = inlined_call_operand.vmem [shape: f32[8,1], index: 0, kind: input, shape index: {}]
  %s1 = inlined_call_operand.vmem [shape: f32[8,1], index: 1, kind: input, shape index: {}]
  %s2 = inlined_call_operand.vmem [shape: f32[8,256], index: 2, kind: input, shape index: {}, may-alias: {2,4}]
  %s3 = inlined_call_operand.vmem [shape: f32[8,256], index: 3, kind: input, shape index: {}, may-alias: {3,5}]
  %s4 = inlined_call_operand.vmem [shape: f32[8,256], index: 4, kind: output, shape index: {0}, may-alias: {2,4}]
  %s5 = inlined_call_operand.vmem [shape: f32[8,256], index: 5, kind: output, shape index: {1}, may-alias: {3,5}]
  %6 = xla_tuple %s4, %s5
  %s7 = sld [smem:[#allocation0]]
  $region34: #{_normalize_many.1} parent=0
    _
  %s9 = ssub.s32 1, %s7
  %s10 = scalar_select 0, %s9, %s7
  // Predicated region
  $region2: #{_normalize_many.1} parent=0 // pred_check
    _
  $region3: #{_normalize_many.1} parent=0 // pred_check_branch
    %12 = sbr.rel (0) target = $region5
  $region4: #{_normalize_many.1} parent=0 // pred_region
    _
  $region5: #{_normalize_many.1} parent=0 // pred_fallthru
    _
  // Predicated region
  $region6: #{_normalize_many.1} parent=0 // pred_check
    _
  $region7: #{_normalize_many.1} parent=0 // pred_check_branch
    %14 = sbr.rel (0) target = $region9
  $region8: #{_normalize_many.1} parent=0 // pred_region
    _
  $region9: #{_normalize_many.1} parent=0 // pred_fallthru
    _
  // Predicated region
  $region10: #{_normalize_many.1} parent=0 // pred_check
    _
  $region11: #{_normalize_many.1} parent=0 // pred_check_branch
    %16 = sbr.rel (0) target = $region13
  $region12: #{_normalize_many.1} parent=0 // pred_region
    _
  $region13: #{_normalize_many.1} parent=0 // pred_fallthru
    _
  // Predicated region
  $region14: #{_normalize_many.1} parent=0 // pred_check
    _
  $region15: #{_normalize_many.1} parent=0 // pred_check_branch
    %18 = sbr.rel (0) target = $region17
  $region16: #{_normalize_many.1} parent=0 // pred_region
    _
  $region17: #{_normalize_many.1} parent=0 // pred_fallthru
    _
  %v19 = vld [vmem:[%s0] sm:$0xff]
  %v20 = vld [vmem:[%s1] sm:$0xff]
  %v21 = vld [vmem:[%s2] sm:$0xff]
  %v22 = vld [vmem:[%s2 + $0x8] sm:$0xff]
  %24 = vset.pattern.permute.xlu0 0
  %25 = vperm.xlu0 %24, %v19
  %v26 = vpop.permute.xlu0 %25
  %v28 = vmul.f32 %v21, %v26
  %v29 = vmul.f32 %v22, %v26
  %31 = vset.pattern.permute.xlu0 0
  %32 = vperm.xlu0 %31, %v20
  %v33 = vpop.permute.xlu0 %32
  %v35 = vadd.f32 %v28, %v33
  %v36 = vadd.f32 %v29, %v33
  %37 = vst [vmem:[%s4] sm:$0xff] %v35
  %38 = vst [vmem:[%s4 + $0x8] sm:$0xff] %v36
  %v39 = vld [vmem:[%s3] sm:$0xff]
  %v40 = vld [vmem:[%s3 + $0x8] sm:$0xff]
  %v41 = vmul.f32 %v39, %v26
  %v42 = vmul.f32 %v40, %v26
  %v43 = vadd.f32 %v41, %v33
  %v44 = vadd.f32 %v42, %v33
  %45 = vst [vmem:[%s5] sm:$0xff] %v43
  %46 = vst [vmem:[%s5 + $0x8] sm:$0xff] %v44
  // Predicated region
  $region18: #{_normalize_many.1} parent=0 // pred_check
    _
  $region19: #{_normalize_many.1} parent=0 // pred_check_branch
    %48 = sbr.rel (0) target = $region21
  $region20: #{_normalize_many.1} parent=0 // pred_region
    _
  $region21: #{_normalize_many.1} parent=0 // pred_fallthru
    _
  // Predicated region
  $region22: #{_normalize_many.1} parent=0 // pred_check
    _
  $region23: #{_normalize_many.1} parent=0 // pred_check_branch
    %50 = sbr.rel (0) target = $region25
  $region24: #{_normalize_many.1} parent=0 // pred_region
    _
  $region25: #{_normalize_many.1} parent=0 // pred_fallthru
    _
  // Predicated region
  $region26: #{_normalize_many.1} parent=0 // pred_check
    _
  $region27: #{_normalize_many.1} parent=0 // pred_check_branch
    %52 = sbr.rel (0) target = $region29
  $region28: #{_normalize_many.1} parent=0 // pred_region
    _
  $region29: #{_normalize_many.1} parent=0 // pred_fallthru
    _
  // Predicated region
  $region30: #{_normalize_many.1} parent=0 // pred_check
    _
  $region31: #{_normalize_many.1} parent=0 // pred_check_branch
    %54 = sbr.rel (0) target = $region33
  $region32: #{_normalize_many.1} parent=0 // pred_region
    _
  $region33: #{_normalize_many.1} parent=0 // pred_fallthru
    _

</llo_original>
